<compile_context>
chip_gen: v5e
topology: v5e:2x2
jax: 0.10.0
libtpu: 0.0.40
codegen_flags: <defaults>
</compile_context>

<pallas_src>
import jax
import jax.numpy as jnp
from jax import lax
from jax.experimental import pallas as pl
from jax.experimental.pallas import tpu as pltpu


def _lstm_last_kernel(x_ref, wih_ref, whh_ref, bias_ref, out_ref):
    """Whole-sequence LSTM, returning only the last hidden state.

    x_ref    : (T*B, IP)  time-major flattened input, feature dim zero-padded
    wih_ref  : (IP, 4H)   input weight, transposed PyTorch weight_ih (padded)
    whh_ref  : (H, 4H)    recurrent weight, transposed PyTorch weight_hh
    bias_ref : (1, 4H)    b_ih + b_hh
    out_ref  : (B, H)     last-timestep hidden state
    """
    B, H = out_ref.shape
    TB = x_ref.shape[0]
    T = TB // B
    H4 = whh_ref.shape[1]

    # ---- Off the serial chain: input projection for ALL timesteps at once ----
    gx = jnp.dot(x_ref[...], wih_ref[...],
                 preferred_element_type=jnp.float32) + bias_ref[...]   # (T*B, 4H)

    # Loop-invariant recurrent weight, loaded once.
    whh = whh_ref[...]                                                 # (H, 4H)
    # TODO(synk): hold whh in the MXU weight registers across the unrolled loop
    # via pltpu.matmul_push_rhs / matmul_acc_lhs / matmul_pop (and seed the MRB
    # with gx[t] on v7x); kept on jnp.dot here until the shape/ISA constraints
    # of those primitives are validated on hardware.
    # TODO(synk): feeding the recurrent matmul in bf16 (cast whh once + h per
    # step) cuts MXU passes ~3x on the serial chain but drifts outside the
    # 1e-4 tolerance vs. the f32 reference, so it is intentionally disabled.

    # Full-lane-width nonlinearity constants (computed once, outside the loop):
    #   sigmoid(x) = 0.5 * tanh(0.5 * x) + 0.5     (i, f, o lanes)
    #   tanh(x)    = 1.0 * tanh(1.0 * x) + 0.0     (g lanes)
    lane = lax.broadcasted_iota(jnp.int32, (1, H4), 1)
    is_g_lane = (lane >= 2 * H) & (lane < 3 * H)
    scale = jnp.where(is_g_lane, 1.0, 0.5).astype(jnp.float32)         # (1, 4H)
    offset = jnp.where(is_g_lane, 0.0, 0.5).astype(jnp.float32)        # (1, 4H)

    h = jnp.zeros((B, H), jnp.float32)
    c = jnp.zeros((B, H), jnp.float32)

    # T is small and static: plain Python loop == full unroll, static slices.
    for t in range(T):
        # Only the h-dependent matmul sits on the serial critical path.
        gates = gx[t * B:(t + 1) * B, :] + jnp.dot(
            h, whh, preferred_element_type=jnp.float32)                # (B, 4H)
        # One 128-lane tanh covers all four gates.
        act = scale * jnp.tanh(scale * gates) + offset                 # [i|f|g|o]
        # TODO(synk): replace the lane slices below with pltpu.roll-aligned
        # full-width state updates (keeps everything at 128 lanes, XLU slot).
        i_g = act[:, 0 * H:1 * H]
        f_g = act[:, 1 * H:2 * H]
        g_g = act[:, 2 * H:3 * H]
        o_g = act[:, 3 * H:4 * H]
        c = f_g * c + i_g * g_g
        h = o_g * jnp.tanh(c)

    out_ref[...] = h.astype(out_ref.dtype)


@jax.jit
def resource_lstm_forward(x, w_ih, w_hh, b_ih, b_hh):
    """x: (B, T, I) float32 (batch_first, like PyTorch). Returns (B, H)."""
    B, T, I = x.shape
    H4 = w_ih.shape[0]
    H = H4 // 4
    # Note: T == 0 is not supported (PyTorch's out[:, -1, :] would also fail).

    # Pad the tiny input-feature (contraction) dim up to a full sublane group
    # so the in-kernel projection matmul sees an aligned (T*B, IP) x (IP, 4H).
    IP = max(8, ((I + 7) // 8) * 8)

    x_tm = jnp.transpose(x, (1, 0, 2)).reshape(T * B, I).astype(jnp.float32)
    x_pad = jnp.pad(x_tm, ((0, 0), (0, IP - I)))                       # (T*B, IP)
    wih_t = jnp.pad(jnp.transpose(w_ih, (1, 0)).astype(jnp.float32),
                    ((0, IP - I), (0, 0)))                             # (IP, 4H)
    whh_t = jnp.transpose(w_hh, (1, 0)).astype(jnp.float32)            # (H, 4H)
    bias = (b_ih + b_hh).astype(jnp.float32).reshape(1, H4)            # (1, 4H)

    out = pl.pallas_call(
        _lstm_last_kernel,
        out_shape=jax.ShapeDtypeStruct((B, H), jnp.float32),
        in_specs=[
            pl.BlockSpec((T * B, IP), lambda: (0, 0)),   # x, full, resident
            pl.BlockSpec((IP, H4), lambda: (0, 0)),      # W_ih^T (padded)
            pl.BlockSpec((H, H4), lambda: (0, 0)),       # W_hh^T
            pl.BlockSpec((1, H4), lambda: (0, 0)),       # fused bias
        ],
        out_specs=pl.BlockSpec((B, H), lambda: (0, 0)),
        compiler_params=pltpu.CompilerParams(
            vmem_limit_bytes=32 * 1024 * 1024,  # tiny footprint; safe on v7x too
        ),
    )(x_pad, wih_t, whh_t, bias)
    return out


def _lstm_reference(x, w_ih, w_hh, b_ih, b_hh):
    """Pure-JAX reference matching torch.nn.LSTM(batch_first=True)[..., -1, :]."""
    B, T, I = x.shape
    H = w_hh.shape[1]

    def step(carry, x_t):
        h, c = carry
        gates = x_t @ w_ih.T + b_ih + h @ w_hh.T + b_hh
        i = jax.nn.sigmoid(gates[:, 0 * H:1 * H])
        f = jax.nn.sigmoid(gates[:, 1 * H:2 * H])
        g = jnp.tanh(gates[:, 2 * H:3 * H])
        o = jax.nn.sigmoid(gates[:, 3 * H:4 * H])
        c = f * c + i * g
        h = o * jnp.tanh(c)
        return (h, c), h

    h0 = jnp.zeros((B, H), jnp.float32)
    c0 = jnp.zeros((B, H), jnp.float32)
    (h_last, _), _ = lax.scan(step, (h0, c0), jnp.transpose(x, (1, 0, 2)))
    return h_last


if __name__ == "__main__":
    # Module defaults: input_size=2, hidden_size=32, num_layers=1.
    # B could grow to 8 (f32) / 16 (bf16) at identical per-step cost — the gate
    # vreg currently uses only 2 of 8 sublanes.
    B, T, I, H = 2, 8, 2, 32

    key = jax.random.PRNGKey(0)
    kx, k1, k2, k3, k4 = jax.random.split(key, 5)

    # Deterministic synthetic parameters (PyTorch-style uniform(-1/sqrt(H), 1/sqrt(H))).
    s = 1.0 / jnp.sqrt(jnp.float32(H))
    x = jax.random.normal(kx, (B, T, I), dtype=jnp.float32)
    w_ih = jax.random.uniform(k1, (4 * H, I), minval=-s, maxval=s, dtype=jnp.float32)
    w_hh = jax.random.uniform(k2, (4 * H, H), minval=-s, maxval=s, dtype=jnp.float32)
    b_ih = jax.random.uniform(k3, (4 * H,), minval=-s, maxval=s, dtype=jnp.float32)
    b_hh = jax.random.uniform(k4, (4 * H,), minval=-s, maxval=s, dtype=jnp.float32)

    out = resource_lstm_forward(x, w_ih, w_hh, b_ih, b_hh)
    out = jax.block_until_ready(out)

    ref = _lstm_reference(x, w_ih, w_hh, b_ih, b_hh)
    assert out.shape == (B, H), out.shape
    assert jnp.allclose(out, ref, atol=1e-4, rtol=1e-4), float(jnp.max(jnp.abs(out - ref)))

    print("KERNEL_OK")
</pallas_src>

<mosaic_0001>
module attributes {stable_mosaic.version = 11 : i64} {
  func.func @_lstm_last_kernel(%arg0: memref<16x8xf32, #tpu.memory_space<vmem>>, %arg1: memref<8x128xf32, #tpu.memory_space<vmem>>, %arg2: memref<32x128xf32, #tpu.memory_space<vmem>>, %arg3: memref<1x128xf32, #tpu.memory_space<vmem>>, %arg4: memref<2x32xf32, #tpu.memory_space<vmem>>) attributes {dimension_semantics = [], scalar_prefetch = 0 : i64, scratch_operands = 0 : i64, tpu.core_type = #tpu.core_type<tc>} {
    %c0 = arith.constant 0 : index
    %c0_0 = arith.constant 0 : index
    %0 = vector.load %arg0[%c0, %c0_0] : memref<16x8xf32, #tpu.memory_space<vmem>>, vector<16x8xf32>
    %c0_1 = arith.constant 0 : index
    %c0_2 = arith.constant 0 : index
    %1 = vector.load %arg1[%c0_1, %c0_2] : memref<8x128xf32, #tpu.memory_space<vmem>>, vector<8x128xf32>
    %cst = arith.constant dense<0.000000e+00> : vector<16x128xf32>
    %2 = tpu.matmul %0, %1, %cst {dimension_numbers = #tpu.dot_dimension_numbers<[1], [0], [0], [1], [0, 0, 1, 1], [], []>} : vector<16x8xf32>, vector<8x128xf32>, vector<16x128xf32> -> vector<16x128xf32>
    %c0_3 = arith.constant 0 : index
    %c0_4 = arith.constant 0 : index
    %3 = vector.load %arg3[%c0_3, %c0_4] : memref<1x128xf32, #tpu.memory_space<vmem>>, vector<1x128xf32>
    %4 = vector.broadcast %3 : vector<1x128xf32> to vector<16x128xf32>
    %5 = arith.addf %2, %4 : vector<16x128xf32>
    %c0_5 = arith.constant 0 : index
    %c0_6 = arith.constant 0 : index
    %6 = vector.load %arg2[%c0_5, %c0_6] : memref<32x128xf32, #tpu.memory_space<vmem>>, vector<32x128xf32>
    %7 = tpu.iota {dimensions = array<i32: 1>} : vector<1x128xi32>
    %c64_i32 = arith.constant 64 : i32
    %8 = vector.broadcast %c64_i32 : i32 to vector<1x128xi32>
    %9 = arith.cmpi sge, %7, %8 : vector<1x128xi32>
    %c96_i32 = arith.constant 96 : i32
    %10 = vector.broadcast %c96_i32 : i32 to vector<1x128xi32>
    %11 = arith.cmpi slt, %7, %10 : vector<1x128xi32>
    %12 = arith.andi %9, %11 : vector<1x128xi1>
    %cst_7 = arith.constant 1.000000e+00 : f32
    %cst_8 = arith.constant 5.000000e-01 : f32
    %13 = vector.broadcast %cst_7 : f32 to vector<1x128xf32>
    %14 = vector.broadcast %cst_8 : f32 to vector<1x128xf32>
    %15 = arith.select %12, %13, %14 : vector<1x128xi1>, vector<1x128xf32>
    %cst_9 = arith.constant 0.000000e+00 : f32
    %cst_10 = arith.constant 5.000000e-01 : f32
    %16 = vector.broadcast %cst_9 : f32 to vector<1x128xf32>
    %17 = vector.broadcast %cst_10 : f32 to vector<1x128xf32>
    %18 = arith.select %12, %16, %17 : vector<1x128xi1>, vector<1x128xf32>
    %cst_11 = arith.constant 0.000000e+00 : f32
    %19 = vector.broadcast %cst_11 : f32 to vector<2x32xf32>
    %cst_12 = arith.constant 0.000000e+00 : f32
    %20 = vector.broadcast %cst_12 : f32 to vector<2x32xf32>
    %21 = vector.extract_strided_slice %5 {offsets = [0, 0], sizes = [2, 128], strides = [1, 1]} : vector<16x128xf32> to vector<2x128xf32>
    %cst_13 = arith.constant dense<0.000000e+00> : vector<2x128xf32>
    %22 = tpu.matmul %19, %6, %cst_13 {dimension_numbers = #tpu.dot_dimension_numbers<[1], [0], [0], [1], [0, 0, 1, 1], [], []>} : vector<2x32xf32>, vector<32x128xf32>, vector<2x128xf32> -> vector<2x128xf32>
    %23 = arith.addf %21, %22 : vector<2x128xf32>
    %24 = vector.broadcast %15 : vector<1x128xf32> to vector<2x128xf32>
    %25 = arith.mulf %24, %23 : vector<2x128xf32>
    %26 = math.tanh %25 : vector<2x128xf32>
    %27 = vector.broadcast %15 : vector<1x128xf32> to vector<2x128xf32>
    %28 = arith.mulf %27, %26 : vector<2x128xf32>
    %29 = vector.broadcast %18 : vector<1x128xf32> to vector<2x128xf32>
    %30 = arith.addf %28, %29 : vector<2x128xf32>
    %31 = vector.extract_strided_slice %30 {offsets = [0, 0], sizes = [2, 32], strides = [1, 1]} : vector<2x128xf32> to vector<2x32xf32>
    %32 = vector.extract_strided_slice %30 {offsets = [0, 32], sizes = [2, 32], strides = [1, 1]} : vector<2x128xf32> to vector<2x32xf32>
    %33 = vector.extract_strided_slice %30 {offsets = [0, 64], sizes = [2, 32], strides = [1, 1]} : vector<2x128xf32> to vector<2x32xf32>
    %34 = vector.extract_strided_slice %30 {offsets = [0, 96], sizes = [2, 32], strides = [1, 1]} : vector<2x128xf32> to vector<2x32xf32>
    %35 = arith.mulf %32, %20 : vector<2x32xf32>
    %36 = arith.mulf %31, %33 : vector<2x32xf32>
    %37 = arith.addf %35, %36 : vector<2x32xf32>
    %38 = math.tanh %37 : vector<2x32xf32>
    %39 = arith.mulf %34, %38 : vector<2x32xf32>
    %40 = vector.extract_strided_slice %5 {offsets = [2, 0], sizes = [2, 128], strides = [1, 1]} : vector<16x128xf32> to vector<2x128xf32>
    %cst_14 = arith.constant dense<0.000000e+00> : vector<2x128xf32>
    %41 = tpu.matmul %39, %6, %cst_14 {dimension_numbers = #tpu.dot_dimension_numbers<[1], [0], [0], [1], [0, 0, 1, 1], [], []>} : vector<2x32xf32>, vector<32x128xf32>, vector<2x128xf32> -> vector<2x128xf32>
    %42 = arith.addf %40, %41 : vector<2x128xf32>
    %43 = vector.broadcast %15 : vector<1x128xf32> to vector<2x128xf32>
    %44 = arith.mulf %43, %42 : vector<2x128xf32>
    %45 = math.tanh %44 : vector<2x128xf32>
    %46 = vector.broadcast %15 : vector<1x128xf32> to vector<2x128xf32>
    %47 = arith.mulf %46, %45 : vector<2x128xf32>
    %48 = vector.broadcast %18 : vector<1x128xf32> to vector<2x128xf32>
    %49 = arith.addf %47, %48 : vector<2x128xf32>
    %50 = vector.extract_strided_slice %49 {offsets = [0, 0], sizes = [2, 32], strides = [1, 1]} : vector<2x128xf32> to vector<2x32xf32>
    %51 = vector.extract_strided_slice %49 {offsets = [0, 32], sizes = [2, 32], strides = [1, 1]} : vector<2x128xf32> to vector<2x32xf32>
    %52 = vector.extract_strided_slice %49 {offsets = [0, 64], sizes = [2, 32], strides = [1, 1]} : vector<2x128xf32> to vector<2x32xf32>
    %53 = vector.extract_strided_slice %49 {offsets = [0, 96], sizes = [2, 32], strides = [1, 1]} : vector<2x128xf32> to vector<2x32xf32>
    %54 = arith.mulf %51, %37 : vector<2x32xf32>
    %55 = arith.mulf %50, %52 : vector<2x32xf32>
    %56 = arith.addf %54, %55 : vector<2x32xf32>
    %57 = math.tanh %56 : vector<2x32xf32>
    %58 = arith.mulf %53, %57 : vector<2x32xf32>
    %59 = vector.extract_strided_slice %5 {offsets = [4, 0], sizes = [2, 128], strides = [1, 1]} : vector<16x128xf32> to vector<2x128xf32>
    %cst_15 = arith.constant dense<0.000000e+00> : vector<2x128xf32>
    %60 = tpu.matmul %58, %6, %cst_15 {dimension_numbers = #tpu.dot_dimension_numbers<[1], [0], [0], [1], [0, 0, 1, 1], [], []>} : vector<2x32xf32>, vector<32x128xf32>, vector<2x128xf32> -> vector<2x128xf32>
    %61 = arith.addf %59, %60 : vector<2x128xf32>
    %62 = vector.broadcast %15 : vector<1x128xf32> to vector<2x128xf32>
    %63 = arith.mulf %62, %61 : vector<2x128xf32>
    %64 = math.tanh %63 : vector<2x128xf32>
    %65 = vector.broadcast %15 : vector<1x128xf32> to vector<2x128xf32>
    %66 = arith.mulf %65, %64 : vector<2x128xf32>
    %67 = vector.broadcast %18 : vector<1x128xf32> to vector<2x128xf32>
    %68 = arith.addf %66, %67 : vector<2x128xf32>
    %69 = vector.extract_strided_slice %68 {offsets = [0, 0], sizes = [2, 32], strides = [1, 1]} : vector<2x128xf32> to vector<2x32xf32>
    %70 = vector.extract_strided_slice %68 {offsets = [0, 32], sizes = [2, 32], strides = [1, 1]} : vector<2x128xf32> to vector<2x32xf32>
    %71 = vector.extract_strided_slice %68 {offsets = [0, 64], sizes = [2, 32], strides = [1, 1]} : vector<2x128xf32> to vector<2x32xf32>
    %72 = vector.extract_strided_slice %68 {offsets = [0, 96], sizes = [2, 32], strides = [1, 1]} : vector<2x128xf32> to vector<2x32xf32>
    %73 = arith.mulf %70, %56 : vector<2x32xf32>
    %74 = arith.mulf %69, %71 : vector<2x32xf32>
    %75 = arith.addf %73, %74 : vector<2x32xf32>
    %76 = math.tanh %75 : vector<2x32xf32>
    %77 = arith.mulf %72, %76 : vector<2x32xf32>
    %78 = vector.extract_strided_slice %5 {offsets = [6, 0], sizes = [2, 128], strides = [1, 1]} : vector<16x128xf32> to vector<2x128xf32>
    %cst_16 = arith.constant dense<0.000000e+00> : vector<2x128xf32>
    %79 = tpu.matmul %77, %6, %cst_16 {dimension_numbers = #tpu.dot_dimension_numbers<[1], [0], [0], [1], [0, 0, 1, 1], [], []>} : vector<2x32xf32>, vector<32x128xf32>, vector<2x128xf32> -> vector<2x128xf32>
    %80 = arith.addf %78, %79 : vector<2x128xf32>
    %81 = vector.broadcast %15 : vector<1x128xf32> to vector<2x128xf32>
    %82 = arith.mulf %81, %80 : vector<2x128xf32>
    %83 = math.tanh %82 : vector<2x128xf32>
    %84 = vector.broadcast %15 : vector<1x128xf32> to vector<2x128xf32>
    %85 = arith.mulf %84, %83 : vector<2x128xf32>
    %86 = vector.broadcast %18 : vector<1x128xf32> to vector<2x128xf32>
    %87 = arith.addf %85, %86 : vector<2x128xf32>
    %88 = vector.extract_strided_slice %87 {offsets = [0, 0], sizes = [2, 32], strides = [1, 1]} : vector<2x128xf32> to vector<2x32xf32>
    %89 = vector.extract_strided_slice %87 {offsets = [0, 32], sizes = [2, 32], strides = [1, 1]} : vector<2x128xf32> to vector<2x32xf32>
    %90 = vector.extract_strided_slice %87 {offsets = [0, 64], sizes = [2, 32], strides = [1, 1]} : vector<2x128xf32> to vector<2x32xf32>
    %91 = vector.extract_strided_slice %87 {offsets = [0, 96], sizes = [2, 32], strides = [1, 1]} : vector<2x128xf32> to vector<2x32xf32>
    %92 = arith.mulf %89, %75 : vector<2x32xf32>
    %93 = arith.mulf %88, %90 : vector<2x32xf32>
    %94 = arith.addf %92, %93 : vector<2x32xf32>
    %95 = math.tanh %94 : vector<2x32xf32>
    %96 = arith.mulf %91, %95 : vector<2x32xf32>
    %97 = vector.extract_strided_slice %5 {offsets = [8, 0], sizes = [2, 128], strides = [1, 1]} : vector<16x128xf32> to vector<2x128xf32>
    %cst_17 = arith.constant dense<0.000000e+00> : vector<2x128xf32>
    %98 = tpu.matmul %96, %6, %cst_17 {dimension_numbers = #tpu.dot_dimension_numbers<[1], [0], [0], [1], [0, 0, 1, 1], [], []>} : vector<2x32xf32>, vector<32x128xf32>, vector<2x128xf32> -> vector<2x128xf32>
    %99 = arith.addf %97, %98 : vector<2x128xf32>
    %100 = vector.broadcast %15 : vector<1x128xf32> to vector<2x128xf32>
    %101 = arith.mulf %100, %99 : vector<2x128xf32>
    %102 = math.tanh %101 : vector<2x128xf32>
    %103 = vector.broadcast %15 : vector<1x128xf32> to vector<2x128xf32>
    %104 = arith.mulf %103, %102 : vector<2x128xf32>
    %105 = vector.broadcast %18 : vector<1x128xf32> to vector<2x128xf32>
    %106 = arith.addf %104, %105 : vector<2x128xf32>
    %107 = vector.extract_strided_slice %106 {offsets = [0, 0], sizes = [2, 32], strides = [1, 1]} : vector<2x128xf32> to vector<2x32xf32>
    %108 = vector.extract_strided_slice %106 {offsets = [0, 32], sizes = [2, 32], strides = [1, 1]} : vector<2x128xf32> to vector<2x32xf32>
    %109 = vector.extract_strided_slice %106 {offsets = [0, 64], sizes = [2, 32], strides = [1, 1]} : vector<2x128xf32> to vector<2x32xf32>
    %110 = vector.extract_strided_slice %106 {offsets = [0, 96], sizes = [2, 32], strides = [1, 1]} : vector<2x128xf32> to vector<2x32xf32>
    %111 = arith.mulf %108, %94 : vector<2x32xf32>
    %112 = arith.mulf %107, %109 : vector<2x32xf32>
    %113 = arith.addf %111, %112 : vector<2x32xf32>
    %114 = math.tanh %113 : vector<2x32xf32>
    %115 = arith.mulf %110, %114 : vector<2x32xf32>
    %116 = vector.extract_strided_slice %5 {offsets = [10, 0], sizes = [2, 128], strides = [1, 1]} : vector<16x128xf32> to vector<2x128xf32>
    %cst_18 = arith.constant dense<0.000000e+00> : vector<2x128xf32>
    %117 = tpu.matmul %115, %6, %cst_18 {dimension_numbers = #tpu.dot_dimension_numbers<[1], [0], [0], [1], [0, 0, 1, 1], [], []>} : vector<2x32xf32>, vector<32x128xf32>, vector<2x128xf32> -> vector<2x128xf32>
    %118 = arith.addf %116, %117 : vector<2x128xf32>
    %119 = vector.broadcast %15 : vector<1x128xf32> to vector<2x128xf32>
    %120 = arith.mulf %119, %118 : vector<2x128xf32>
    %121 = math.tanh %120 : vector<2x128xf32>
    %122 = vector.broadcast %15 : vector<1x128xf32> to vector<2x128xf32>
    %123 = arith.mulf %122, %121 : vector<2x128xf32>
    %124 = vector.broadcast %18 : vector<1x128xf32> to vector<2x128xf32>
    %125 = arith.addf %123, %124 : vector<2x128xf32>
    %126 = vector.extract_strided_slice %125 {offsets = [0, 0], sizes = [2, 32], strides = [1, 1]} : vector<2x128xf32> to vector<2x32xf32>
    %127 = vector.extract_strided_slice %125 {offsets = [0, 32], sizes = [2, 32], strides = [1, 1]} : vector<2x128xf32> to vector<2x32xf32>
    %128 = vector.extract_strided_slice %125 {offsets = [0, 64], sizes = [2, 32], strides = [1, 1]} : vector<2x128xf32> to vector<2x32xf32>
    %129 = vector.extract_strided_slice %125 {offsets = [0, 96], sizes = [2, 32], strides = [1, 1]} : vector<2x128xf32> to vector<2x32xf32>
    %130 = arith.mulf %127, %113 : vector<2x32xf32>
    %131 = arith.mulf %126, %128 : vector<2x32xf32>
    %132 = arith.addf %130, %131 : vector<2x32xf32>
    %133 = math.tanh %132 : vector<2x32xf32>
    %134 = arith.mulf %129, %133 : vector<2x32xf32>
    %135 = vector.extract_strided_slice %5 {offsets = [12, 0], sizes = [2, 128], strides = [1, 1]} : vector<16x128xf32> to vector<2x128xf32>
    %cst_19 = arith.constant dense<0.000000e+00> : vector<2x128xf32>
    %136 = tpu.matmul %134, %6, %cst_19 {dimension_numbers = #tpu.dot_dimension_numbers<[1], [0], [0], [1], [0, 0, 1, 1], [], []>} : vector<2x32xf32>, vector<32x128xf32>, vector<2x128xf32> -> vector<2x128xf32>
    %137 = arith.addf %135, %136 : vector<2x128xf32>
    %138 = vector.broadcast %15 : vector<1x128xf32> to vector<2x128xf32>
    %139 = arith.mulf %138, %137 : vector<2x128xf32>
    %140 = math.tanh %139 : vector<2x128xf32>
    %141 = vector.broadcast %15 : vector<1x128xf32> to vector<2x128xf32>
    %142 = arith.mulf %141, %140 : vector<2x128xf32>
    %143 = vector.broadcast %18 : vector<1x128xf32> to vector<2x128xf32>
    %144 = arith.addf %142, %143 : vector<2x128xf32>
    %145 = vector.extract_strided_slice %144 {offsets = [0, 0], sizes = [2, 32], strides = [1, 1]} : vector<2x128xf32> to vector<2x32xf32>
    %146 = vector.extract_strided_slice %144 {offsets = [0, 32], sizes = [2, 32], strides = [1, 1]} : vector<2x128xf32> to vector<2x32xf32>
    %147 = vector.extract_strided_slice %144 {offsets = [0, 64], sizes = [2, 32], strides = [1, 1]} : vector<2x128xf32> to vector<2x32xf32>
    %148 = vector.extract_strided_slice %144 {offsets = [0, 96], sizes = [2, 32], strides = [1, 1]} : vector<2x128xf32> to vector<2x32xf32>
    %149 = arith.mulf %146, %132 : vector<2x32xf32>
    %150 = arith.mulf %145, %147 : vector<2x32xf32>
    %151 = arith.addf %149, %150 : vector<2x32xf32>
    %152 = math.tanh %151 : vector<2x32xf32>
    %153 = arith.mulf %148, %152 : vector<2x32xf32>
    %154 = vector.extract_strided_slice %5 {offsets = [14, 0], sizes = [2, 128], strides = [1, 1]} : vector<16x128xf32> to vector<2x128xf32>
    %cst_20 = arith.constant dense<0.000000e+00> : vector<2x128xf32>
    %155 = tpu.matmul %153, %6, %cst_20 {dimension_numbers = #tpu.dot_dimension_numbers<[1], [0], [0], [1], [0, 0, 1, 1], [], []>} : vector<2x32xf32>, vector<32x128xf32>, vector<2x128xf32> -> vector<2x128xf32>
    %156 = arith.addf %154, %155 : vector<2x128xf32>
    %157 = vector.broadcast %15 : vector<1x128xf32> to vector<2x128xf32>
    %158 = arith.mulf %157, %156 : vector<2x128xf32>
    %159 = math.tanh %158 : vector<2x128xf32>
    %160 = vector.broadcast %15 : vector<1x128xf32> to vector<2x128xf32>
    %161 = arith.mulf %160, %159 : vector<2x128xf32>
    %162 = vector.broadcast %18 : vector<1x128xf32> to vector<2x128xf32>
    %163 = arith.addf %161, %162 : vector<2x128xf32>
    %164 = vector.extract_strided_slice %163 {offsets = [0, 0], sizes = [2, 32], strides = [1, 1]} : vector<2x128xf32> to vector<2x32xf32>
    %165 = vector.extract_strided_slice %163 {offsets = [0, 32], sizes = [2, 32], strides = [1, 1]} : vector<2x128xf32> to vector<2x32xf32>
    %166 = vector.extract_strided_slice %163 {offsets = [0, 64], sizes = [2, 32], strides = [1, 1]} : vector<2x128xf32> to vector<2x32xf32>
    %167 = vector.extract_strided_slice %163 {offsets = [0, 96], sizes = [2, 32], strides = [1, 1]} : vector<2x128xf32> to vector<2x32xf32>
    %168 = arith.mulf %165, %151 : vector<2x32xf32>
    %169 = arith.mulf %164, %166 : vector<2x32xf32>
    %170 = arith.addf %168, %169 : vector<2x32xf32>
    %171 = math.tanh %170 : vector<2x32xf32>
    %172 = arith.mulf %167, %171 : vector<2x32xf32>
    %c0_21 = arith.constant 0 : index
    %c0_22 = arith.constant 0 : index
    %173 = vector.load %arg4[%c0_21, %c0_22] : memref<2x32xf32, #tpu.memory_space<vmem>>, vector<2x32xf32>
    tpu.vector_store %arg4[%c0_21, %c0_22], %172 {strides = array<i32>} : memref<2x32xf32, #tpu.memory_space<vmem>>, vector<2x32xf32>,
    return
  }
}

</mosaic_0001>

<llo_original>
// kernel: resource_lstm_forward.1
$region0: #{resource_lstm_forward.1}
  #allocation0 [shape = 'u32[]', space=smem, size = 0x4, offset = 0x4, fixed_abs, tag = 'smem constant byte address 0x4 - core index']
  #allocation1 [shape = 'u32[72,128]{1,0:T(1,128)}', space=vmem, size = 0x9000, scoped, tag = 'internal scratch']
  %s0 = inlined_call_operand.vmem [shape: f32[16,8], index: 0, kind: input, shape index: {}]
  %s1 = inlined_call_operand.vmem [shape: f32[8,128], index: 1, kind: input, shape index: {}]
  %s2 = inlined_call_operand.vmem [shape: f32[32,128], index: 2, kind: input, shape index: {}]
  %s3 = inlined_call_operand.vmem [shape: f32[1,128], index: 3, kind: input, shape index: {}]
  %s4 = inlined_call_operand.hbm [shape: f32[2,32], index: 4, kind: output, shape index: {}]
  %s5 = sld [smem:[#allocation0]]
  $region26: #{resource_lstm_forward.1} parent=0
    _
  %s7 = ssub.s32 1, %s5
  %s8 = scalar_select 0, %s7, %s5
  $region1: #{resource_lstm_forward.1} parent=0
    #allocation2 [shape = 'u8[1024]{0}', space=vmem, size = 0x400, scoped, tag = 'output window, operand 0, single buffered']
    #allocation3 [shape = 's32[1]{0}', space=sflag, size = 0x4, scoped, tag = 'scoped memory for resource_lstm_forward.1']
    %9 = vsyncpa [#allocation3], 0
    // Predicated region
    $region2: #{resource_lstm_forward.1} parent=1 // pred_check
      _
    $region3: #{resource_lstm_forward.1} parent=1 // pred_check_branch
      %11 = sbr.rel (0) target = $region5
    $region4: #{resource_lstm_forward.1} parent=1 // pred_region
      _
    $region5: #{resource_lstm_forward.1} parent=1 // pred_fallthru
      _
    // Predicated region
    $region6: #{resource_lstm_forward.1} parent=1 // pred_check
      _
    $region7: #{resource_lstm_forward.1} parent=1 // pred_check_branch
      %13 = sbr.rel (0) target = $region9
    $region8: #{resource_lstm_forward.1} parent=1 // pred_region
      _
    $region9: #{resource_lstm_forward.1} parent=1 // pred_fallthru
      _
    // Predicated region
    $region10: #{resource_lstm_forward.1} parent=1 // pred_check
      _
    $region11: #{resource_lstm_forward.1} parent=1 // pred_check_branch
      %15 = sbr.rel (0) target = $region13
    $region12: #{resource_lstm_forward.1} parent=1 // pred_region
      _
    $region13: #{resource_lstm_forward.1} parent=1 // pred_fallthru
      _
    // Predicated region
    $region14: #{resource_lstm_forward.1} parent=1 // pred_check
      _
    $region15: #{resource_lstm_forward.1} parent=1 // pred_check_branch
      %17 = sbr.rel (0) target = $region17
    $region16: #{resource_lstm_forward.1} parent=1 // pred_region
      _
    $region17: #{resource_lstm_forward.1} parent=1 // pred_fallthru
      _
    %v18 = vld [vmem:[%s0] sm:$0xff]
    %v19 = vld [vmem:[%s0 + $0x8] sm:$0xff]
    %v20 = vld [vmem:[%s1] sm:$0xff]
    %v21 = vld [vmem:[%s3] sm:$0x1]
    %v23 = vperm.slane %v21, 0
    %vm25 = vcmask 64512
    %v27 = vsel %vm25, %v18, 0
    %v30 = vsel %vm25, %v19, 0
    %32 = vmatpush.msra.mxu0 0.0
    %33 = vmatpush.msra.mxu0 0.0
    %34 = vmatpush.msra.mxu0 0.0
    %35 = vmatpush.msra.mxu0 0.0
    %36 = vmatpush.msra.mxu0 0.0
    %37 = vmatpush.msra.mxu0 0.0
    %38 = vmatpush.msra.mxu0 0.0
    %39 = vmatpush.msra.mxu0 0.0
    %40 = vmatpush.msra.mxu0 0.0
    %41 = vmatpush.msra.mxu0 0.0
    %42 = vmatpush.msra.mxu0 0.0
    %43 = vmatpush.msra.mxu0 0.0
    %44 = vmatpush.msra.mxu0 0.0
    %45 = vmatpush.msra.mxu0 0.0
    %46 = vmatpush.msra.mxu0 0.0
    %47 = vmatpush.msra.mxu0 %v20
    %48 = vmatmul.f32.gmra.mxu0 %v27
    %v49 = vpop.f32.mrf.mxu0
    %v50 = vadd.f32 %v23, %v49
    %51 = vmatmul.f32.gmra.mxu0 %v30
    %v52 = vpop.f32.mrf.mxu0
    %v53 = vadd.f32 %v23, %v52
    %54 = vdwg.mxu0
    %v55 = vld [vmem:[%s2] sm:$0xff]
    %v56 = vld [vmem:[%s2 + $0x8] sm:$0xff]
    %v57 = vld [vmem:[%s2 + $0x10] sm:$0xff]
    %v58 = vld [vmem:[%s2 + $0x18] sm:$0xff]
    %v59 = vlaneseq
    %v60 = vand.u32 %v59, 127
    %vm61 = vcmp.ge.s32.totalorder %v60, 64
    %vm62 = vcmp.lt.s32.totalorder %v60, 96
    %vm63 = vmand %vm61, %vm62
    %v64 = vsel %vm63, 1.0, 0.5
    %v65 = vsel %vm63, 0.0, 0.5
    %vm66 = vcmask 261120
    %v68 = vsel %vm66, 0.0, 0
    %70 = vmatpush.msra.mxu0 0.0
    %71 = vmatpush.msra.mxu0 0.0
    %72 = vmatpush.msra.mxu0 0.0
    %73 = vmatpush.msra.mxu0 0.0
    %74 = vmatpush.msra.mxu0 0.0
    %75 = vmatpush.msra.mxu0 0.0
    %76 = vmatpush.msra.mxu0 0.0
    %77 = vmatpush.msra.mxu0 0.0
    %78 = vmatpush.msra.mxu0 0.0
    %79 = vmatpush.msra.mxu0 0.0
    %80 = vmatpush.msra.mxu0 0.0
    %81 = vmatpush.msra.mxu0 0.0
    %82 = vmatpush.msra.mxu0 %v58
    %83 = vmatpush.msra.mxu0 %v57
    %84 = vmatpush.msra.mxu0 %v56
    %85 = vmatpush.msra.mxu0 %v55
    %86 = vmatmul.f32.gmra.mxu0 %v68
    %v87 = vpop.f32.mrf.mxu0
    %v88 = vadd.f32 0.0, %v87
    %89 = vdwg.mxu0
    %v90 = vadd.f32 %v50, %v88
    %v91 = vmul.f32 %v64, %v90
    %v92 = vtanh.pop %v91
    %v93 = vmul.f32 %v64, %v92
    %v94 = vadd.f32 %v93, %v65
    %v95 = vmul.f32 %v94, 0.0
    %97 = vrot.lane.b32.xlu0 %v94, 64
    %v98 = vpop.permute.xlu0 %97
    %v100 = vmul.f32 %v94, %v98
    %102 = vrot.lane.b32.xlu0 %v100, 32
    %v103 = vpop.permute.xlu0 %102
    %v105 = vadd.f32 %v95, %v103
    %v106 = vtanh.pop %v105
    %108 = vrot.lane.b32.xlu0 %v106, 64
    %v109 = vpop.permute.xlu0 %108
    %v111 = vmul.f32 %v94, %v109
    %113 = vrot.lane.b32.xlu0 %v111, 32
    %v114 = vpop.permute.xlu0 %113
    %v115 = vsel %vm66, %v114, 0
    %117 = vmatpush.msra.mxu0 0.0
    %118 = vmatpush.msra.mxu0 0.0
    %119 = vmatpush.msra.mxu0 0.0
    %120 = vmatpush.msra.mxu0 0.0
    %121 = vmatpush.msra.mxu0 0.0
    %122 = vmatpush.msra.mxu0 0.0
    %123 = vmatpush.msra.mxu0 0.0
    %124 = vmatpush.msra.mxu0 0.0
    %125 = vmatpush.msra.mxu0 0.0
    %126 = vmatpush.msra.mxu0 0.0
    %127 = vmatpush.msra.mxu0 0.0
    %128 = vmatpush.msra.mxu0 0.0
    %129 = vmatpush.msra.mxu0 %v58
    %130 = vmatpush.msra.mxu0 %v57
    %131 = vmatpush.msra.mxu0 %v56
    %132 = vmatpush.msra.mxu0 %v55
    %133 = vmatmul.f32.gmra.mxu0 %v115
    %v134 = vpop.f32.mrf.mxu0
    %v135 = vadd.f32 0.0, %v134
    %136 = vdwg.mxu0
    %v138 = vrot.slane %v135, 6
    %v140 = vadd.f32 %v50, %v138
    %v141 = vmul.f32 %v64, %v140
    %v142 = vtanh.pop %v141
    %v143 = vmul.f32 %v64, %v142
    %v144 = vadd.f32 %v143, %v65
    %v146 = vrot.slane %v105, 6
    %v148 = vmul.f32 %v144, %v146
    %150 = vrot.lane.b32.xlu0 %v144, 64
    %v151 = vpop.permute.xlu0 %150
    %v153 = vmul.f32 %v144, %v151
    %155 = vrot.lane.b32.xlu0 %v153, 32
    %v156 = vpop.permute.xlu0 %155
    %v158 = vadd.f32 %v148, %v156
    %v159 = vtanh.pop %v158
    %161 = vrot.lane.b32.xlu0 %v159, 64
    %v162 = vpop.permute.xlu0 %161
    %v164 = vmul.f32 %v144, %v162
    %v166 = vrot.slane %v164, 2
    %167 = vrot.lane.b32.xlu0 %v166, 32
    %v168 = vpop.permute.xlu0 %167
    %v169 = vsel %vm66, %v168, 0
    %171 = vmatpush.msra.mxu0 0.0
    %172 = vmatpush.msra.mxu0 0.0
    %173 = vmatpush.msra.mxu0 0.0
    %174 = vmatpush.msra.mxu0 0.0
    %175 = vmatpush.msra.mxu0 0.0
    %176 = vmatpush.msra.mxu0 0.0
    %177 = vmatpush.msra.mxu0 0.0
    %178 = vmatpush.msra.mxu0 0.0
    %179 = vmatpush.msra.mxu0 0.0
    %180 = vmatpush.msra.mxu0 0.0
    %181 = vmatpush.msra.mxu0 0.0
    %182 = vmatpush.msra.mxu0 0.0
    %183 = vmatpush.msra.mxu0 %v58
    %184 = vmatpush.msra.mxu0 %v57
    %185 = vmatpush.msra.mxu0 %v56
    %186 = vmatpush.msra.mxu0 %v55
    %187 = vmatmul.f32.gmra.mxu0 %v169
    %v188 = vpop.f32.mrf.mxu0
    %v189 = vadd.f32 0.0, %v188
    %190 = vdwg.mxu0
    %v192 = vrot.slane %v189, 4
    %v194 = vadd.f32 %v50, %v192
    %v195 = vmul.f32 %v64, %v194
    %v196 = vtanh.pop %v195
    %v197 = vmul.f32 %v64, %v196
    %v198 = vadd.f32 %v197, %v65
    %v200 = vrot.slane %v158, 6
    %v202 = vmul.f32 %v198, %v200
    %204 = vrot.lane.b32.xlu0 %v198, 64
    %v205 = vpop.permute.xlu0 %204
    %v207 = vmul.f32 %v198, %v205
    %209 = vrot.lane.b32.xlu0 %v207, 32
    %v210 = vpop.permute.xlu0 %209
    %v212 = vadd.f32 %v202, %v210
    %v213 = vtanh.pop %v212
    %215 = vrot.lane.b32.xlu0 %v213, 64
    %v216 = vpop.permute.xlu0 %215
    %v218 = vmul.f32 %v198, %v216
    %v220 = vrot.slane %v218, 4
    %221 = vrot.lane.b32.xlu0 %v220, 32
    %v222 = vpop.permute.xlu0 %221
    %v223 = vsel %vm66, %v222, 0
    %225 = vmatpush.msra.mxu0 0.0
    %226 = vmatpush.msra.mxu0 0.0
    %227 = vmatpush.msra.mxu0 0.0
    %228 = vmatpush.msra.mxu0 0.0
    %229 = vmatpush.msra.mxu0 0.0
    %230 = vmatpush.msra.mxu0 0.0
    %231 = vmatpush.msra.mxu0 0.0
    %232 = vmatpush.msra.mxu0 0.0
    %233 = vmatpush.msra.mxu0 0.0
    %234 = vmatpush.msra.mxu0 0.0
    %235 = vmatpush.msra.mxu0 0.0
    %236 = vmatpush.msra.mxu0 0.0
    %237 = vmatpush.msra.mxu0 %v58
    %238 = vmatpush.msra.mxu0 %v57
    %239 = vmatpush.msra.mxu0 %v56
    %240 = vmatpush.msra.mxu0 %v55
    %241 = vmatmul.f32.gmra.mxu0 %v223
    %v242 = vpop.f32.mrf.mxu0
    %v243 = vadd.f32 0.0, %v242
    %244 = vdwg.mxu0
    %v246 = vrot.slane %v243, 2
    %v248 = vadd.f32 %v50, %v246
    %v249 = vmul.f32 %v64, %v248
    %v250 = vtanh.pop %v249
    %v251 = vmul.f32 %v64, %v250
    %v252 = vadd.f32 %v251, %v65
    %v254 = vrot.slane %v212, 6
    %v256 = vmul.f32 %v252, %v254
    %258 = vrot.lane.b32.xlu0 %v252, 64
    %v259 = vpop.permute.xlu0 %258
    %v261 = vmul.f32 %v252, %v259
    %263 = vrot.lane.b32.xlu0 %v261, 32
    %v264 = vpop.permute.xlu0 %263
    %v266 = vadd.f32 %v256, %v264
    %v267 = vtanh.pop %v266
    %269 = vrot.lane.b32.xlu0 %v267, 64
    %v270 = vpop.permute.xlu0 %269
    %v272 = vmul.f32 %v252, %v270
    %v274 = vrot.slane %v272, 6
    %275 = vrot.lane.b32.xlu0 %v274, 32
    %v276 = vpop.permute.xlu0 %275
    %v277 = vsel %vm66, %v276, 0
    %279 = vmatpush.msra.mxu0 0.0
    %280 = vmatpush.msra.mxu0 0.0
    %281 = vmatpush.msra.mxu0 0.0
    %282 = vmatpush.msra.mxu0 0.0
    %283 = vmatpush.msra.mxu0 0.0
    %284 = vmatpush.msra.mxu0 0.0
    %285 = vmatpush.msra.mxu0 0.0
    %286 = vmatpush.msra.mxu0 0.0
    %287 = vmatpush.msra.mxu0 0.0
    %288 = vmatpush.msra.mxu0 0.0
    %289 = vmatpush.msra.mxu0 0.0
    %290 = vmatpush.msra.mxu0 0.0
    %291 = vmatpush.msra.mxu0 %v58
    %292 = vmatpush.msra.mxu0 %v57
    %293 = vmatpush.msra.mxu0 %v56
    %294 = vmatpush.msra.mxu0 %v55
    %295 = vmatmul.f32.gmra.mxu0 %v277
    %v296 = vpop.f32.mrf.mxu0
    %v297 = vadd.f32 0.0, %v296
    %298 = vdwg.mxu0
    %v299 = vadd.f32 %v53, %v297
    %v300 = vmul.f32 %v64, %v299
    %v301 = vtanh.pop %v300
    %v302 = vmul.f32 %v64, %v301
    %v303 = vadd.f32 %v302, %v65
    %v305 = vrot.slane %v266, 6
    %v307 = vmul.f32 %v303, %v305
    %309 = vrot.lane.b32.xlu0 %v303, 64
    %v310 = vpop.permute.xlu0 %309
    %v312 = vmul.f32 %v303, %v310
    %314 = vrot.lane.b32.xlu0 %v312, 32
    %v315 = vpop.permute.xlu0 %314
    %v317 = vadd.f32 %v307, %v315
    %v318 = vtanh.pop %v317
    %320 = vrot.lane.b32.xlu0 %v318, 64
    %v321 = vpop.permute.xlu0 %320
    %v323 = vmul.f32 %v303, %v321
    %325 = vrot.lane.b32.xlu0 %v323, 32
    %v326 = vpop.permute.xlu0 %325
    %v327 = vsel %vm66, %v326, 0
    %329 = vmatpush.msra.mxu0 0.0
    %330 = vmatpush.msra.mxu0 0.0
    %331 = vmatpush.msra.mxu0 0.0
    %332 = vmatpush.msra.mxu0 0.0
    %333 = vmatpush.msra.mxu0 0.0
    %334 = vmatpush.msra.mxu0 0.0
    %335 = vmatpush.msra.mxu0 0.0
    %336 = vmatpush.msra.mxu0 0.0
    %337 = vmatpush.msra.mxu0 0.0
    %338 = vmatpush.msra.mxu0 0.0
    %339 = vmatpush.msra.mxu0 0.0
    %340 = vmatpush.msra.mxu0 0.0
    %341 = vmatpush.msra.mxu0 %v58
    %342 = vmatpush.msra.mxu0 %v57
    %343 = vmatpush.msra.mxu0 %v56
    %344 = vmatpush.msra.mxu0 %v55
    %345 = vmatmul.f32.gmra.mxu0 %v327
    %v346 = vpop.f32.mrf.mxu0
    %v347 = vadd.f32 0.0, %v346
    %348 = vdwg.mxu0
    %v350 = vrot.slane %v347, 6
    %v352 = vadd.f32 %v53, %v350
    %v353 = vmul.f32 %v64, %v352
    %v354 = vtanh.pop %v353
    %v355 = vmul.f32 %v64, %v354
    %v356 = vadd.f32 %v355, %v65
    %v358 = vrot.slane %v317, 6
    %v360 = vmul.f32 %v356, %v358
    %362 = vrot.lane.b32.xlu0 %v356, 64
    %v363 = vpop.permute.xlu0 %362
    %v365 = vmul.f32 %v356, %v363
    %367 = vrot.lane.b32.xlu0 %v365, 32
    %v368 = vpop.permute.xlu0 %367
    %v370 = vadd.f32 %v360, %v368
    %v371 = vtanh.pop %v370
    %373 = vrot.lane.b32.xlu0 %v371, 64
    %v374 = vpop.permute.xlu0 %373
    %v376 = vmul.f32 %v356, %v374
    %v378 = vrot.slane %v376, 2
    %379 = vrot.lane.b32.xlu0 %v378, 32
    %v380 = vpop.permute.xlu0 %379
    %v381 = vsel %vm66, %v380, 0
    %383 = vmatpush.msra.mxu0 0.0
    %384 = vmatpush.msra.mxu0 0.0
    %385 = vmatpush.msra.mxu0 0.0
    %386 = vmatpush.msra.mxu0 0.0
    %387 = vmatpush.msra.mxu0 0.0
    %388 = vmatpush.msra.mxu0 0.0
    %389 = vmatpush.msra.mxu0 0.0
    %390 = vmatpush.msra.mxu0 0.0
    %391 = vmatpush.msra.mxu0 0.0
    %392 = vmatpush.msra.mxu0 0.0
    %393 = vmatpush.msra.mxu0 0.0
    %394 = vmatpush.msra.mxu0 0.0
    %395 = vmatpush.msra.mxu0 %v58
    %396 = vmatpush.msra.mxu0 %v57
    %397 = vmatpush.msra.mxu0 %v56
    %398 = vmatpush.msra.mxu0 %v55
    %399 = vmatmul.f32.gmra.mxu0 %v381
    %v400 = vpop.f32.mrf.mxu0
    %v401 = vadd.f32 0.0, %v400
    %402 = vdwg.mxu0
    %v404 = vrot.slane %v401, 4
    %v406 = vadd.f32 %v53, %v404
    %v407 = vmul.f32 %v64, %v406
    %v408 = vtanh.pop %v407
    %v409 = vmul.f32 %v64, %v408
    %v410 = vadd.f32 %v409, %v65
    %v412 = vrot.slane %v370, 6
    %v414 = vmul.f32 %v410, %v412
    %416 = vrot.lane.b32.xlu0 %v410, 64
    %v417 = vpop.permute.xlu0 %416
    %v419 = vmul.f32 %v410, %v417
    %421 = vrot.lane.b32.xlu0 %v419, 32
    %v422 = vpop.permute.xlu0 %421
    %v424 = vadd.f32 %v414, %v422
    %v425 = vtanh.pop %v424
    %427 = vrot.lane.b32.xlu0 %v425, 64
    %v428 = vpop.permute.xlu0 %427
    %v430 = vmul.f32 %v410, %v428
    %v432 = vrot.slane %v430, 4
    %433 = vrot.lane.b32.xlu0 %v432, 32
    %v434 = vpop.permute.xlu0 %433
    %v435 = vsel %vm66, %v434, 0
    %437 = vmatpush.msra.mxu0 0.0
    %438 = vmatpush.msra.mxu0 0.0
    %439 = vmatpush.msra.mxu0 0.0
    %440 = vmatpush.msra.mxu0 0.0
    %441 = vmatpush.msra.mxu0 0.0
    %442 = vmatpush.msra.mxu0 0.0
    %443 = vmatpush.msra.mxu0 0.0
    %444 = vmatpush.msra.mxu0 0.0
    %445 = vmatpush.msra.mxu0 0.0
    %446 = vmatpush.msra.mxu0 0.0
    %447 = vmatpush.msra.mxu0 0.0
    %448 = vmatpush.msra.mxu0 0.0
    %449 = vmatpush.msra.mxu0 %v58
    %450 = vmatpush.msra.mxu0 %v57
    %451 = vmatpush.msra.mxu0 %v56
    %452 = vmatpush.msra.mxu0 %v55
    %453 = vmatmul.f32.gmra.mxu0 %v435
    %v454 = vpop.f32.mrf.mxu0
    %v455 = vadd.f32 0.0, %v454
    %456 = vdwg.mxu0
    %v458 = vrot.slane %v455, 2
    %v460 = vadd.f32 %v53, %v458
    %v461 = vmul.f32 %v64, %v460
    %v462 = vtanh.pop %v461
    %v463 = vmul.f32 %v64, %v462
    %v464 = vadd.f32 %v463, %v65
    %v466 = vrot.slane %v424, 6
    %v468 = vmul.f32 %v464, %v466
    %470 = vrot.lane.b32.xlu0 %v464, 64
    %v471 = vpop.permute.xlu0 %470
    %v473 = vmul.f32 %v464, %v471
    %475 = vrot.lane.b32.xlu0 %v473, 32
    %v476 = vpop.permute.xlu0 %475
    %v478 = vadd.f32 %v468, %v476
    %v479 = vtanh.pop %v478
    %481 = vrot.lane.b32.xlu0 %v479, 64
    %v482 = vpop.permute.xlu0 %481
    %v484 = vmul.f32 %v464, %v482
    %486 = vrot.lane.b32.xlu0 %v484, 32
    %v487 = vpop.permute.xlu0 %486
    %vm489 = vcmask 261126
    %490 = vst.msk [vmem:[#allocation2 - $0x6] sm:$0xc0] %vm489, %v487
    // Predicated region
    $region18: #{resource_lstm_forward.1} parent=1 // pred_check
      _
    $region19: #{resource_lstm_forward.1} parent=1 // pred_check_branch
      %492 = sbr.rel (0) target = $region21
    $region20: #{resource_lstm_forward.1} parent=1 // pred_region
      %494 = vsyncadd [#allocation3], 0
      %s496 = sshll.u32 [#allocation2], 4
      %s497 = int_to_ptr.vmem [resolvable:$true] %s496
      %s498 = sshll.u32 %s4, 4
      %s499 = int_to_ptr.hbm [resolvable:$true] %s498
      %501 = dma.vmem_to_hbm [thread:$0]  %s497, 32, %s499, [#allocation3]
    $region21: #{resource_lstm_forward.1} parent=1 // pred_fallthru
      _
    // Predicated region
    $region22: #{resource_lstm_forward.1} parent=1 // pred_check
      _
    $region23: #{resource_lstm_forward.1} parent=1 // pred_check_branch
      %503 = sbr.rel (0) target = $region25
    $region24: #{resource_lstm_forward.1} parent=1 // pred_region
      %505 = dma.done [#allocation3], 32
    $region25: #{resource_lstm_forward.1} parent=1 // pred_fallthru
      _
    %506 = vsyncpa [#allocation3], 1

</llo_original>
